<compile_context>
chip_gen: v7x
topology: tpu7x:2x2x1
jax: 0.10.0
libtpu: 0.0.40
codegen_flags: <defaults>
</compile_context>

<pallas_src>
import jax
import jax.numpy as jnp
from jax.experimental import pallas as pl
from jax.experimental.pallas import tpu as pltpu


def _normalization_kernel(img_ref, scale_ref, bias_ref, out_ref):
    # out = img * (1/std) + (-mean/std); scale/bias are (tile_r, 1) and
    # broadcast across the lane (pixel) axis.
    out_ref[...] = img_ref[...] * scale_ref[...] + bias_ref[...]


def _pick_tiles(R, P, itemsize, max_block_bytes=2 * 1024 * 1024):
    """Pick (tile_r, tile_p) for the (R, P) = (N*C, H*W) view.

    tile_p: largest multiple-of-128 divisor of P such that even the minimum
            row tile (8 sublanes) stays within the per-block VMEM budget.
    tile_r: largest multiple-of-8 divisor of R such that the block fits the
            budget.  Non-aligned extents fall back to the full axis (a
            full-extent block always satisfies the (8, 128) constraint).
    """
    # Lane (pixel) tile.
    if P % 128 != 0:
        tile_p = P
    else:
        lane_cap = max(128, max_block_bytes // (8 * itemsize))
        tile_p = 128
        t = 256
        while t <= min(P, lane_cap):
            if P % t == 0:
                tile_p = t
            t += 128
    # Row (N*C) tile.
    if R % 8 != 0:
        tile_r = R
    else:
        tile_r = 8
        t = 16
        while t <= R and t * tile_p * itemsize <= max_block_bytes:
            if R % t == 0:
                tile_r = t
            t += 8
    return tile_r, tile_p


def normalization(img, mean, std):
    """(img - mean) / std with per-channel mean/std.

    img:  (N, C, H, W)
    mean: (C,) or (C, 1, 1)
    std:  (C,) or (C, 1, 1)
    """
    N, C, H, W = img.shape
    P = H * W
    R = N * C
    itemsize = jnp.dtype(img.dtype).itemsize

    # Fold mean/std into per-channel scale/bias (C-element work, done once on
    # host) so the streaming loop has no per-element divide, then tile across
    # the batch so each row of the (N*C, H*W) view indexes its own constant.
    mean_c = jnp.reshape(mean, (C,)).astype(jnp.float32)
    std_c = jnp.reshape(std, (C,)).astype(jnp.float32)
    scale = jnp.tile(1.0 / std_c, (N,)).reshape(R, 1).astype(img.dtype)
    bias = jnp.tile(-mean_c / std_c, (N,)).reshape(R, 1).astype(img.dtype)

    # Lane/sublane-dense layout: NCHW is already contiguous as (N*C, H*W), so
    # this reshape is free.
    img2 = jnp.reshape(img, (R, P))

    tile_r, tile_p = _pick_tiles(R, P, itemsize)
    grid = (R // tile_r, P // tile_p)

    out2 = pl.pallas_call(
        _normalization_kernel,
        out_shape=jax.ShapeDtypeStruct((R, P), img.dtype),
        grid_spec=pltpu.PrefetchScalarGridSpec(
            num_scalar_prefetch=0,
            grid=grid,
            in_specs=[
                pl.BlockSpec((tile_r, tile_p), lambda r, p: (r, p)),
                pl.BlockSpec((tile_r, 1), lambda r, p: (r, 0)),
                pl.BlockSpec((tile_r, 1), lambda r, p: (r, 0)),
            ],
            out_specs=pl.BlockSpec((tile_r, tile_p), lambda r, p: (r, p)),
        ),
        compiler_params=pltpu.CompilerParams(
            dimension_semantics=("parallel", "parallel"),
        ),
        cost_estimate=pl.CostEstimate(
            flops=2 * R * P,
            transcendentals=0,
            bytes_accessed=2 * R * P * itemsize + 4 * R * itemsize,
        ),
    )(img2, scale, bias)

    return jnp.reshape(out2, (N, C, H, W))


if __name__ == "__main__":
    key = jax.random.PRNGKey(0)

    N, C, H, W = 2, 4, 16, 16
    img = jax.random.uniform(key, (N, C, H, W), dtype=jnp.float32)

    # Deterministic per-channel normalization constants (same role as the
    # (C, 1, 1)-viewed buffers in Normalization.__init__).
    mean = jnp.array([0.485, 0.456, 0.406, 0.5], dtype=jnp.float32)
    std = jnp.array([0.229, 0.224, 0.225, 0.25], dtype=jnp.float32)

    out = jax.block_until_ready(normalization(img, mean, std))

    # Reference check in plain JAX (identical semantics to the PyTorch module).
    ref = (img - mean.reshape(1, C, 1, 1)) / std.reshape(1, C, 1, 1)
    assert out.shape == (N, C, H, W)
    # scale/bias refactor reassociates the arithmetic -> allow a few ulps.
    assert jnp.allclose(out, ref, atol=1e-5, rtol=1e-5)

    print("KERNEL_OK")
</pallas_src>

<mosaic_0001>
module attributes {stable_mosaic.version = 11 : i64} {
  func.func @_normalization_kernel(%arg0: i32, %arg1: i32, %arg2: memref<8x256xf32, #tpu.memory_space<vmem>>, %arg3: memref<8x1xf32, #tpu.memory_space<vmem>>, %arg4: memref<8x1xf32, #tpu.memory_space<vmem>>, %arg5: memref<8x256xf32, #tpu.memory_space<vmem>>) attributes {dimension_semantics = [#tpu.dimension_semantics<parallel>, #tpu.dimension_semantics<parallel>], iteration_bounds = array<i64: 1, 1>, scalar_prefetch = 0 : i64, scratch_operands = 0 : i64, tpu.core_type = #tpu.core_type<tc>, window_params = [{transform_indices = @transform_0, window_bounds = array<i64: 8, 256>}, {transform_indices = @transform_1, window_bounds = array<i64: 8, 1>}, {transform_indices = @transform_2, window_bounds = array<i64: 8, 1>}, {transform_indices = @transform_3, window_bounds = array<i64: 8, 256>}]} {
    %c0 = arith.constant 0 : index
    %c0_0 = arith.constant 0 : index
    %0 = vector.load %arg2[%c0, %c0_0] : memref<8x256xf32, #tpu.memory_space<vmem>>, vector<8x256xf32>
    %c0_1 = arith.constant 0 : index
    %c0_2 = arith.constant 0 : index
    %1 = vector.load %arg3[%c0_1, %c0_2] : memref<8x1xf32, #tpu.memory_space<vmem>>, vector<8x1xf32>
    %2 = vector.broadcast %1 : vector<8x1xf32> to vector<8x256xf32>
    %3 = arith.mulf %0, %2 : vector<8x256xf32>
    %c0_3 = arith.constant 0 : index
    %c0_4 = arith.constant 0 : index
    %4 = vector.load %arg4[%c0_3, %c0_4] : memref<8x1xf32, #tpu.memory_space<vmem>>, vector<8x1xf32>
    %5 = vector.broadcast %4 : vector<8x1xf32> to vector<8x256xf32>
    %6 = arith.addf %3, %5 : vector<8x256xf32>
    %c0_5 = arith.constant 0 : index
    %c0_6 = arith.constant 0 : index
    %7 = vector.load %arg5[%c0_5, %c0_6] : memref<8x256xf32, #tpu.memory_space<vmem>>, vector<8x256xf32>
    tpu.vector_store %arg5[%c0_5, %c0_6], %6 {strides = array<i32>} : memref<8x256xf32, #tpu.memory_space<vmem>>, vector<8x256xf32>,
    return
  }
  func.func @transform_0(%arg0: i32, %arg1: i32) -> (i32, i32) {
    %c0_i32 = arith.constant 0 : i32
    return %arg0, %arg1 : i32, i32
  }
  func.func @transform_1(%arg0: i32, %arg1: i32) -> (i32, i32) {
    %c0_i32 = arith.constant 0 : i32
    %c0_i32_0 = arith.constant 0 : i32
    return %arg0, %c0_i32 : i32, i32
  }
  func.func @transform_2(%arg0: i32, %arg1: i32) -> (i32, i32) {
    %c0_i32 = arith.constant 0 : i32
    %c0_i32_0 = arith.constant 0 : i32
    return %arg0, %c0_i32 : i32, i32
  }
  func.func @transform_3(%arg0: i32, %arg1: i32) -> (i32, i32) {
    %c0_i32 = arith.constant 0 : i32
    return %arg0, %arg1 : i32, i32
  }
}

</mosaic_0001>

<llo_original>
// kernel: tpu_custom_call.1
$region0: #{tpu_custom_call.1}
  #allocation0 [shape = 'u32[]', space=smem, size = 0x4, offset = 0x4, fixed_abs, tag = 'smem constant byte address 0x4 - core index']
  #allocation1 [shape = 'u32[144,128]{1,0:T(1,128)}', space=vmem, size = 0x12000, scoped, tag = 'internal scratch']
  %s0 = inlined_call_operand.vmem [shape: f32[8,256], index: 0, kind: input, shape index: {}]
  %s1 = inlined_call_operand.vmem [shape: f32[8,1], index: 1, kind: input, shape index: {}]
  %s2 = inlined_call_operand.vmem [shape: f32[8,1], index: 2, kind: input, shape index: {}]
  %s3 = inlined_call_operand.hbm [shape: f32[8,256], index: 3, kind: output, shape index: {}]
  %s4 = sld [smem:[#allocation0]]
  $region22: #{tpu_custom_call.1} parent=0
    _
  %s6 = ssub.s32 1, %s4
  %s7 = scalar_select 0, %s6, %s4
  $region1: #{tpu_custom_call.1} parent=0
    #allocation2 [shape = 'u8[8192]{0}', space=vmem, size = 0x2000, scoped, tag = 'output window, operand 0, single buffered']
    #allocation3 [shape = 's32[1]{0}', space=sflag, size = 0x4, scoped, tag = 'scoped memory for tpu_custom_call.1']
    %8 = vsyncpa [#allocation3], 0
    // Predicated region
    $region2: #{tpu_custom_call.1} parent=1 // pred_check
      _
    $region3: #{tpu_custom_call.1} parent=1 // pred_check_branch
      %10 = sbr.rel (0) target = $region5
    $region4: #{tpu_custom_call.1} parent=1 // pred_region
      _
    $region5: #{tpu_custom_call.1} parent=1 // pred_fallthru
      _
    // Predicated region
    $region6: #{tpu_custom_call.1} parent=1 // pred_check
      _
    $region7: #{tpu_custom_call.1} parent=1 // pred_check_branch
      %12 = sbr.rel (0) target = $region9
    $region8: #{tpu_custom_call.1} parent=1 // pred_region
      _
    $region9: #{tpu_custom_call.1} parent=1 // pred_fallthru
      _
    // Predicated region
    $region10: #{tpu_custom_call.1} parent=1 // pred_check
      _
    $region11: #{tpu_custom_call.1} parent=1 // pred_check_branch
      %14 = sbr.rel (0) target = $region13
    $region12: #{tpu_custom_call.1} parent=1 // pred_region
      _
    $region13: #{tpu_custom_call.1} parent=1 // pred_fallthru
      _
    %v15 = vld [vmem:[%s0] sm:$0xff]
    %v16 = vld [vmem:[%s0 + $0x8] sm:$0xff]
    %v17 = vld [vmem:[%s1] sm:$0xff]
    %19 = vset.pattern.permute.xlu0 0
    %20 = vperm.xlu0 %19, %v17
    %v21 = vpop.permute.xlu0 %20
    %v23 = vmul.f32 %v15, %v21
    %v24 = vmul.f32 %v16, %v21
    %v25 = vld [vmem:[%s2] sm:$0xff]
    %27 = vset.pattern.permute.xlu0 0
    %28 = vperm.xlu0 %27, %v25
    %v29 = vpop.permute.xlu0 %28
    %v31 = vadd.f32 %v23, %v29
    %v32 = vadd.f32 %v24, %v29
    %33 = vst [vmem:[#allocation2] sm:$0xff] %v31
    %34 = vst [vmem:[#allocation2 + $0x8] sm:$0xff] %v32
    // Predicated region
    $region14: #{tpu_custom_call.1} parent=1 // pred_check
      _
    $region15: #{tpu_custom_call.1} parent=1 // pred_check_branch
      %36 = sbr.rel (0) target = $region17
    $region16: #{tpu_custom_call.1} parent=1 // pred_region
      %s38 = ssub.s32 256, 256
      %39 = vsyncadd [#allocation3], %s38
      %s41 = sshll.u32 [#allocation2], 4
      %s42 = int_to_ptr.vmem [resolvable:$true] %s41
      %44 = dma.vmem_to_hbm [thread:$0]  %s42, 256, %s3, [#allocation3]
    $region17: #{tpu_custom_call.1} parent=1 // pred_fallthru
      _
    // Predicated region
    $region18: #{tpu_custom_call.1} parent=1 // pred_check
      _
    $region19: #{tpu_custom_call.1} parent=1 // pred_check_branch
      %46 = sbr.rel (0) target = $region21
    $region20: #{tpu_custom_call.1} parent=1 // pred_region
      %47 = dma.done [#allocation3], 256
    $region21: #{tpu_custom_call.1} parent=1 // pred_fallthru
      _
    %48 = vsyncpa [#allocation3], 1

</llo_original>
